<compile_context>
chip_gen: v5e
topology: v5e:2x2
jax: 0.10.0
libtpu: 0.0.40
codegen_flags: <defaults>
</compile_context>

<pallas_src>
import jax
import jax.numpy as jnp
from jax.experimental import pallas as pl
from jax.experimental.pallas import tpu as pltpu

LANES = 128               # TPU lane width (last dim of every block)
ACC_ROWS = 8              # accumulator sublane height (one f32 vreg)
STRIP_ROWS = 512          # per-strip working set: 512*128*4B = 256 KiB f32
DEFAULT_TILE_ROWS = 4096  # 4096*128*4B = 2 MiB f32 per input block


def _round_up(x, m):
    return ((x + m - 1) // m) * m


def _default_n_outer():
    """2-way outer split only where one device owns >1 TensorCore."""
    try:
        kind = jax.devices()[0].device_kind.lower()
    except Exception:
        return 2
    single_tc = ("v2", "v3", "v5 lite", "v5e", "v6 lite", "v6e")
    return 1 if any(s in kind for s in single_tc) else 2


def _make_dice_kernel(rows, tile_rows, strip_rows, n_inner):
    """Kernel closure over static shape/grid parameters."""
    n_strips = tile_rows // strip_rows
    folds = strip_rows // ACC_ROWS

    def _strip(x_ref, t_ref, base_row, r0, masked, inter_acc, sum_acc):
        x = x_ref[pl.ds(r0, strip_rows), :].astype(jnp.float32)
        t = t_ref[pl.ds(r0, strip_rows), :].astype(jnp.float32)
        # sigmoid(x) == 0.5 * tanh(0.5 * x) + 0.5  -> one EUP op per element.
        p = 0.5 * jnp.tanh(0.5 * x) + 0.5
        if masked:
            # Row-level validity only (lane tail handled outside the kernel):
            # stays well inside int32 for any tensor that fits in HBM.
            rid = jax.lax.broadcasted_iota(jnp.int32, (strip_rows, LANES), 0)
            valid = (base_row + r0 + rid) < rows
            p = jnp.where(valid, p, 0.0)
            t = jnp.where(valid, t, 0.0)
        pt = (p * t).reshape(folds, ACC_ROWS, LANES)
        st = (p + t).reshape(folds, ACC_ROWS, LANES)
        return inter_acc + jnp.sum(pt, axis=0), sum_acc + jnp.sum(st, axis=0)

    def _block_sums(x_ref, t_ref, base_row, masked):
        # Fully unrolled strip loop (static trip count, concrete slice starts)
        # accumulating into two (8,128) f32 vreg carries.
        ia = jnp.zeros((ACC_ROWS, LANES), jnp.float32)
        sa = jnp.zeros((ACC_ROWS, LANES), jnp.float32)
        for s in range(n_strips):
            ia, sa = _strip(x_ref, t_ref, base_row, s * strip_rows, masked,
                            ia, sa)
        return ia, sa

    def kernel(x_ref, t_ref, inter_ref, sum_ref):
        o = pl.program_id(0)              # outer ("parallel") axis
        i = pl.program_id(1)              # inner ("arbitrary") reduction axis

        @pl.when(i == 0)
        def _():
            inter_ref[...] = jnp.zeros_like(inter_ref)
            sum_ref[...] = jnp.zeros_like(sum_ref)

        b = o * n_inner + i               # unclamped logical block index
        base_row = b * tile_rows
        last_row_excl = base_row + tile_rows

        # Fast path: fully in-bounds block, no mask work at all.
        @pl.when(last_row_excl <= rows)
        def _():
            ia, sa = _block_sums(x_ref, t_ref, base_row, masked=False)
            inter_ref[...] += ia
            sum_ref[...] += sa

        # Slow path: ragged boundary block or clamped duplicate tail block.
        @pl.when(last_row_excl > rows)
        def _():
            ia, sa = _block_sums(x_ref, t_ref, base_row, masked=True)
            inter_ref[...] += ia
            sum_ref[...] += sa

    return kernel


def _dice_sums(x2d, t2d, *, max_tile_rows=DEFAULT_TILE_ROWS, n_outer_max=None):
    """Returns per-outer-block lane-parallel partial sums of p*t and p+t."""
    rows = x2d.shape[0]

    if rows <= STRIP_ROWS:
        # Small input: one block.  Prefer the exact row count (full-dim block,
        # no masking) when it is sublane aligned.
        tile_rows = rows if rows % ACC_ROWS == 0 else _round_up(rows, 32)
        strip_rows = tile_rows
    else:
        tile_rows = min(max_tile_rows, _round_up(rows, STRIP_ROWS))
        strip_rows = STRIP_ROWS

    total_blocks = pl.cdiv(rows, tile_rows)
    if n_outer_max is None:
        n_outer_max = _default_n_outer()
    n_outer = max(1, min(n_outer_max, total_blocks))
    n_inner = pl.cdiv(total_blocks, n_outer)

    kernel = _make_dice_kernel(rows, tile_rows, strip_rows, n_inner)

    def data_map(o, i):
        # Clamp the (rare) fully out-of-range tail blocks to a valid block;
        # the kernel masks their contribution to exactly zero.
        return (jnp.minimum(o * n_inner + i, total_blocks - 1), 0)

    def out_map(o, i):
        return (o, 0, 0)

    data_spec = pl.BlockSpec((tile_rows, LANES), data_map)
    out_spec = pl.BlockSpec((None, ACC_ROWS, LANES), out_map)
    out_sds = jax.ShapeDtypeStruct((n_outer, ACC_ROWS, LANES), jnp.float32)

    return pl.pallas_call(
        kernel,
        out_shape=(out_sds, out_sds),
        grid=(n_outer, n_inner),
        in_specs=[data_spec, data_spec],
        out_specs=(out_spec, out_spec),
        compiler_params=pltpu.CompilerParams(
            dimension_semantics=("parallel", "arbitrary")),
    )(x2d, t2d)


def dice_loss(inputs, targets, smooth=1e-6):
    """Binary DiceLoss forward: 1 - dice_score(inputs, targets).

    Pass the narrowest upstream dtypes (bf16 logits, int8/bf16 targets); the
    cast to f32 happens inside the kernel, so upcasting beforehand only adds
    HBM traffic.
    """
    x = inputs.reshape(-1)
    t = targets.reshape(-1)
    if t.dtype == jnp.bool_:
        t = t.astype(jnp.int8)      # avoid i1 memrefs in the kernel

    n = x.shape[0]
    n_main = (n // LANES) * LANES   # 128-aligned prefix handled by the kernel

    inter = jnp.zeros((), jnp.float32)
    total = jnp.zeros((), jnp.float32)

    if n_main > 0:
        rows = n_main // LANES
        if n_main == n:
            x2d = x.reshape(rows, LANES)
            t2d = t.reshape(rows, LANES)
        else:
            # Rare ragged path: slice off the aligned prefix for the kernel.
            x2d = jax.lax.slice(x, (0,), (n_main,)).reshape(rows, LANES)
            t2d = jax.lax.slice(t, (0,), (n_main,)).reshape(rows, LANES)
        inter_p, sum_p = _dice_sums(x2d, t2d)
        inter = inter + jnp.sum(inter_p)
        total = total + jnp.sum(sum_p)

    if n_main != n:
        # <128-element tail reduced in plain JAX (tiny).
        xt = x[n_main:].astype(jnp.float32)
        tt = t[n_main:].astype(jnp.float32)
        pt = jax.nn.sigmoid(xt)
        inter = inter + jnp.sum(pt * tt)
        total = total + jnp.sum(pt) + jnp.sum(tt)

    dice = (2.0 * inter + smooth) / (total + smooth)
    return (1.0 - dice).astype(jnp.float32)


# TODO(synk): multiclass branch (softmax + one_hot(5) + permute) not
# implemented; the module default is multiclass=False and only the binary
# path is exercised.


def _dice_loss_ref(inputs, targets, smooth=1e-6):
    p = jax.nn.sigmoid(inputs.astype(jnp.float32)).reshape(-1)
    t = targets.astype(jnp.float32).reshape(-1)
    inter = jnp.sum(p * t)
    dice = (2.0 * inter + smooth) / (jnp.sum(p) + jnp.sum(t) + smooth)
    return 1.0 - dice


if __name__ == "__main__":
    key = jax.random.PRNGKey(0)
    kx, kt = jax.random.split(key)
    # NCHW: batch=2, channels=4, spatial=16x16 (logits + binary targets)
    x = jax.random.normal(kx, (2, 4, 16, 16), dtype=jnp.float32)
    t = (jax.random.uniform(kt, (2, 4, 16, 16)) > 0.5).astype(jnp.float32)

    loss = jax.block_until_ready(dice_loss(x, t))
    ref = jax.block_until_ready(_dice_loss_ref(x, t))
    assert jnp.allclose(loss, ref, atol=1e-5, rtol=1e-5), (loss, ref)
    print("KERNEL_OK")
</pallas_src>

<mosaic_0001>
module attributes {stable_mosaic.version = 11 : i64} {
  func.func @kernel(%arg0: i32, %arg1: i32, %arg2: memref<16x128xf32, #tpu.memory_space<vmem>>, %arg3: memref<16x128xf32, #tpu.memory_space<vmem>>, %arg4: memref<1x8x128xf32, #tpu.memory_space<vmem>>, %arg5: memref<1x8x128xf32, #tpu.memory_space<vmem>>) attributes {dimension_semantics = [#tpu.dimension_semantics<parallel>, #tpu.dimension_semantics<arbitrary>], iteration_bounds = array<i64: 1, 1>, scalar_prefetch = 0 : i64, scratch_operands = 0 : i64, tpu.core_type = #tpu.core_type<tc>, window_params = [{transform_indices = @transform_0, window_bounds = array<i64: 16, 128>}, {transform_indices = @transform_1, window_bounds = array<i64: 16, 128>}, {transform_indices = @transform_2, window_bounds = array<i64: 1, 8, 128>}, {transform_indices = @transform_3, window_bounds = array<i64: 1, 8, 128>}]} {
    %c0_i32 = arith.constant 0 : i32
    %0 = arith.cmpi eq, %arg1, %c0_i32 : i32
    %1 = arith.extui %0 : i1 to i32
    %c0_i32_0 = arith.constant 0 : i32
    %2 = arith.cmpi ne, %1, %c0_i32_0 : i32
    scf.if %2 {
      %cst = arith.constant 0.000000e+00 : f32
      %13 = vector.broadcast %cst : f32 to vector<8x128xf32>
      %c0 = arith.constant 0 : index
      %c0_6 = arith.constant 0 : index
      %c0_7 = arith.constant 0 : index
      %14 = vector.load %arg4[%c0, %c0_6, %c0_7] : memref<1x8x128xf32, #tpu.memory_space<vmem>>, vector<1x8x128xf32>
      %15 = vector.shape_cast %14 : vector<1x8x128xf32> to vector<8x128xf32>
      %16 = vector.shape_cast %13 : vector<8x128xf32> to vector<1x8x128xf32>
      tpu.vector_store %arg4[%c0, %c0_6, %c0_7], %16 {strides = array<i32>} : memref<1x8x128xf32, #tpu.memory_space<vmem>>, vector<1x8x128xf32>,
      %cst_8 = arith.constant 0.000000e+00 : f32
      %17 = vector.broadcast %cst_8 : f32 to vector<8x128xf32>
      %c0_9 = arith.constant 0 : index
      %c0_10 = arith.constant 0 : index
      %c0_11 = arith.constant 0 : index
      %18 = vector.load %arg5[%c0_9, %c0_10, %c0_11] : memref<1x8x128xf32, #tpu.memory_space<vmem>>, vector<1x8x128xf32>
      %19 = vector.shape_cast %18 : vector<1x8x128xf32> to vector<8x128xf32>
      %20 = vector.shape_cast %17 : vector<8x128xf32> to vector<1x8x128xf32>
      tpu.vector_store %arg5[%c0_9, %c0_10, %c0_11], %20 {strides = array<i32>} : memref<1x8x128xf32, #tpu.memory_space<vmem>>, vector<1x8x128xf32>,
    } else {
    }
    %c1_i32 = arith.constant 1 : i32
    %3 = arith.muli %arg0, %c1_i32 : i32
    %4 = arith.addi %3, %arg1 : i32
    %c16_i32 = arith.constant 16 : i32
    %5 = arith.muli %4, %c16_i32 : i32
    %c16_i32_1 = arith.constant 16 : i32
    %6 = arith.addi %5, %c16_i32_1 : i32
    %c16_i32_2 = arith.constant 16 : i32
    %7 = arith.cmpi sle, %6, %c16_i32_2 : i32
    %8 = arith.extui %7 : i1 to i32
    %c0_i32_3 = arith.constant 0 : i32
    %9 = arith.cmpi ne, %8, %c0_i32_3 : i32
    scf.if %9 {
      %cst = arith.constant 0.000000e+00 : f32
      %13 = vector.broadcast %cst : f32 to vector<8x128xf32>
      %cst_6 = arith.constant 0.000000e+00 : f32
      %14 = vector.broadcast %cst_6 : f32 to vector<8x128xf32>
      %c0 = arith.constant 0 : index
      %c0_7 = arith.constant 0 : index
      %15 = vector.load %arg2[%c0, %c0_7] : memref<16x128xf32, #tpu.memory_space<vmem>>, vector<16x128xf32>
      %c0_8 = arith.constant 0 : index
      %c0_9 = arith.constant 0 : index
      %16 = vector.load %arg3[%c0_8, %c0_9] : memref<16x128xf32, #tpu.memory_space<vmem>>, vector<16x128xf32>
      %cst_10 = arith.constant 5.000000e-01 : f32
      %17 = vector.broadcast %cst_10 : f32 to vector<16x128xf32>
      %18 = arith.mulf %17, %15 : vector<16x128xf32>
      %19 = math.tanh %18 : vector<16x128xf32>
      %cst_11 = arith.constant 5.000000e-01 : f32
      %20 = vector.broadcast %cst_11 : f32 to vector<16x128xf32>
      %21 = arith.mulf %20, %19 : vector<16x128xf32>
      %cst_12 = arith.constant 5.000000e-01 : f32
      %22 = vector.broadcast %cst_12 : f32 to vector<16x128xf32>
      %23 = arith.addf %21, %22 : vector<16x128xf32>
      %24 = arith.mulf %23, %16 : vector<16x128xf32>
      %25 = vector.shape_cast %24 : vector<16x128xf32> to vector<2x8x128xf32>
      %26 = arith.addf %23, %16 : vector<16x128xf32>
      %27 = vector.shape_cast %26 : vector<16x128xf32> to vector<2x8x128xf32>
      %cst_13 = arith.constant dense<0.000000e+00> : vector<8x128xf32>
      %28 = vector.multi_reduction <add>, %25, %cst_13 [0] : vector<2x8x128xf32> to vector<8x128xf32>
      %29 = arith.addf %13, %28 : vector<8x128xf32>
      %cst_14 = arith.constant dense<0.000000e+00> : vector<8x128xf32>
      %30 = vector.multi_reduction <add>, %27, %cst_14 [0] : vector<2x8x128xf32> to vector<8x128xf32>
      %31 = arith.addf %14, %30 : vector<8x128xf32>
      %c0_15 = arith.constant 0 : index
      %c0_16 = arith.constant 0 : index
      %c0_17 = arith.constant 0 : index
      %32 = vector.load %arg4[%c0_15, %c0_16, %c0_17] : memref<1x8x128xf32, #tpu.memory_space<vmem>>, vector<1x8x128xf32>
      %33 = vector.shape_cast %32 : vector<1x8x128xf32> to vector<8x128xf32>
      %34 = arith.addf %33, %29 : vector<8x128xf32>
      %c0_18 = arith.constant 0 : index
      %c0_19 = arith.constant 0 : index
      %c0_20 = arith.constant 0 : index
      %35 = vector.load %arg4[%c0_18, %c0_19, %c0_20] : memref<1x8x128xf32, #tpu.memory_space<vmem>>, vector<1x8x128xf32>
      %36 = vector.shape_cast %35 : vector<1x8x128xf32> to vector<8x128xf32>
      %37 = vector.shape_cast %34 : vector<8x128xf32> to vector<1x8x128xf32>
      tpu.vector_store %arg4[%c0_18, %c0_19, %c0_20], %37 {strides = array<i32>} : memref<1x8x128xf32, #tpu.memory_space<vmem>>, vector<1x8x128xf32>,
      %c0_21 = arith.constant 0 : index
      %c0_22 = arith.constant 0 : index
      %c0_23 = arith.constant 0 : index
      %38 = vector.load %arg5[%c0_21, %c0_22, %c0_23] : memref<1x8x128xf32, #tpu.memory_space<vmem>>, vector<1x8x128xf32>
      %39 = vector.shape_cast %38 : vector<1x8x128xf32> to vector<8x128xf32>
      %40 = arith.addf %39, %31 : vector<8x128xf32>
      %c0_24 = arith.constant 0 : index
      %c0_25 = arith.constant 0 : index
      %c0_26 = arith.constant 0 : index
      %41 = vector.load %arg5[%c0_24, %c0_25, %c0_26] : memref<1x8x128xf32, #tpu.memory_space<vmem>>, vector<1x8x128xf32>
      %42 = vector.shape_cast %41 : vector<1x8x128xf32> to vector<8x128xf32>
      %43 = vector.shape_cast %40 : vector<8x128xf32> to vector<1x8x128xf32>
      tpu.vector_store %arg5[%c0_24, %c0_25, %c0_26], %43 {strides = array<i32>} : memref<1x8x128xf32, #tpu.memory_space<vmem>>, vector<1x8x128xf32>,
    } else {
    }
    %c16_i32_4 = arith.constant 16 : i32
    %10 = arith.cmpi sgt, %6, %c16_i32_4 : i32
    %11 = arith.extui %10 : i1 to i32
    %c0_i32_5 = arith.constant 0 : i32
    %12 = arith.cmpi ne, %11, %c0_i32_5 : i32
    scf.if %12 {
      %cst = arith.constant 0.000000e+00 : f32
      %13 = vector.broadcast %cst : f32 to vector<8x128xf32>
      %cst_6 = arith.constant 0.000000e+00 : f32
      %14 = vector.broadcast %cst_6 : f32 to vector<8x128xf32>
      %c0 = arith.constant 0 : index
      %c0_7 = arith.constant 0 : index
      %15 = vector.load %arg2[%c0, %c0_7] : memref<16x128xf32, #tpu.memory_space<vmem>>, vector<16x128xf32>
      %c0_8 = arith.constant 0 : index
      %c0_9 = arith.constant 0 : index
      %16 = vector.load %arg3[%c0_8, %c0_9] : memref<16x128xf32, #tpu.memory_space<vmem>>, vector<16x128xf32>
      %cst_10 = arith.constant 5.000000e-01 : f32
      %17 = vector.broadcast %cst_10 : f32 to vector<16x128xf32>
      %18 = arith.mulf %17, %15 : vector<16x128xf32>
      %19 = math.tanh %18 : vector<16x128xf32>
      %cst_11 = arith.constant 5.000000e-01 : f32
      %20 = vector.broadcast %cst_11 : f32 to vector<16x128xf32>
      %21 = arith.mulf %20, %19 : vector<16x128xf32>
      %cst_12 = arith.constant 5.000000e-01 : f32
      %22 = vector.broadcast %cst_12 : f32 to vector<16x128xf32>
      %23 = arith.addf %21, %22 : vector<16x128xf32>
      %24 = tpu.iota {dimensions = array<i32: 0>} : vector<16x128xi32>
      %c0_i32_13 = arith.constant 0 : i32
      %25 = arith.addi %5, %c0_i32_13 : i32
      %26 = vector.broadcast %25 : i32 to vector<16x128xi32>
      %27 = arith.addi %26, %24 : vector<16x128xi32>
      %c16_i32_14 = arith.constant 16 : i32
      %28 = vector.broadcast %c16_i32_14 : i32 to vector<16x128xi32>
      %29 = arith.cmpi slt, %27, %28 : vector<16x128xi32>
      %cst_15 = arith.constant 0.000000e+00 : f32
      %30 = vector.broadcast %cst_15 : f32 to vector<16x128xf32>
      %31 = arith.select %29, %23, %30 : vector<16x128xi1>, vector<16x128xf32>
      %cst_16 = arith.constant 0.000000e+00 : f32
      %32 = vector.broadcast %cst_16 : f32 to vector<16x128xf32>
      %33 = arith.select %29, %16, %32 : vector<16x128xi1>, vector<16x128xf32>
      %34 = arith.mulf %31, %33 : vector<16x128xf32>
      %35 = vector.shape_cast %34 : vector<16x128xf32> to vector<2x8x128xf32>
      %36 = arith.addf %31, %33 : vector<16x128xf32>
      %37 = vector.shape_cast %36 : vector<16x128xf32> to vector<2x8x128xf32>
      %cst_17 = arith.constant dense<0.000000e+00> : vector<8x128xf32>
      %38 = vector.multi_reduction <add>, %35, %cst_17 [0] : vector<2x8x128xf32> to vector<8x128xf32>
      %39 = arith.addf %13, %38 : vector<8x128xf32>
      %cst_18 = arith.constant dense<0.000000e+00> : vector<8x128xf32>
      %40 = vector.multi_reduction <add>, %37, %cst_18 [0] : vector<2x8x128xf32> to vector<8x128xf32>
      %41 = arith.addf %14, %40 : vector<8x128xf32>
      %c0_19 = arith.constant 0 : index
      %c0_20 = arith.constant 0 : index
      %c0_21 = arith.constant 0 : index
      %42 = vector.load %arg4[%c0_19, %c0_20, %c0_21] : memref<1x8x128xf32, #tpu.memory_space<vmem>>, vector<1x8x128xf32>
      %43 = vector.shape_cast %42 : vector<1x8x128xf32> to vector<8x128xf32>
      %44 = arith.addf %43, %39 : vector<8x128xf32>
      %c0_22 = arith.constant 0 : index
      %c0_23 = arith.constant 0 : index
      %c0_24 = arith.constant 0 : index
      %45 = vector.load %arg4[%c0_22, %c0_23, %c0_24] : memref<1x8x128xf32, #tpu.memory_space<vmem>>, vector<1x8x128xf32>
      %46 = vector.shape_cast %45 : vector<1x8x128xf32> to vector<8x128xf32>
      %47 = vector.shape_cast %44 : vector<8x128xf32> to vector<1x8x128xf32>
      tpu.vector_store %arg4[%c0_22, %c0_23, %c0_24], %47 {strides = array<i32>} : memref<1x8x128xf32, #tpu.memory_space<vmem>>, vector<1x8x128xf32>,
      %c0_25 = arith.constant 0 : index
      %c0_26 = arith.constant 0 : index
      %c0_27 = arith.constant 0 : index
      %48 = vector.load %arg5[%c0_25, %c0_26, %c0_27] : memref<1x8x128xf32, #tpu.memory_space<vmem>>, vector<1x8x128xf32>
      %49 = vector.shape_cast %48 : vector<1x8x128xf32> to vector<8x128xf32>
      %50 = arith.addf %49, %41 : vector<8x128xf32>
      %c0_28 = arith.constant 0 : index
      %c0_29 = arith.constant 0 : index
      %c0_30 = arith.constant 0 : index
      %51 = vector.load %arg5[%c0_28, %c0_29, %c0_30] : memref<1x8x128xf32, #tpu.memory_space<vmem>>, vector<1x8x128xf32>
      %52 = vector.shape_cast %51 : vector<1x8x128xf32> to vector<8x128xf32>
      %53 = vector.shape_cast %50 : vector<8x128xf32> to vector<1x8x128xf32>
      tpu.vector_store %arg5[%c0_28, %c0_29, %c0_30], %53 {strides = array<i32>} : memref<1x8x128xf32, #tpu.memory_space<vmem>>, vector<1x8x128xf32>,
    } else {
    }
    return
  }
  func.func @transform_0(%arg0: i32, %arg1: i32) -> (i32, i32) {
    %c1_i32 = arith.constant 1 : i32
    %0 = arith.muli %arg0, %c1_i32 : i32
    %1 = arith.addi %0, %arg1 : i32
    %c0_i32 = arith.constant 0 : i32
    %2 = arith.minsi %1, %c0_i32 : i32
    %c0_i32_0 = arith.constant 0 : i32
    %c0_i32_1 = arith.constant 0 : i32
    return %2, %c0_i32_0 : i32, i32
  }
  func.func @transform_1(%arg0: i32, %arg1: i32) -> (i32, i32) {
    %c1_i32 = arith.constant 1 : i32
    %0 = arith.muli %arg0, %c1_i32 : i32
    %1 = arith.addi %0, %arg1 : i32
    %c0_i32 = arith.constant 0 : i32
    %2 = arith.minsi %1, %c0_i32 : i32
    %c0_i32_0 = arith.constant 0 : i32
    %c0_i32_1 = arith.constant 0 : i32
    return %2, %c0_i32_0 : i32, i32
  }
  func.func @transform_2(%arg0: i32, %arg1: i32) -> (i32, i32, i32) {
    %c0_i32 = arith.constant 0 : i32
    %c0_i32_0 = arith.constant 0 : i32
    %c0_i32_1 = arith.constant 0 : i32
    return %arg0, %c0_i32, %c0_i32_0 : i32, i32, i32
  }
  func.func @transform_3(%arg0: i32, %arg1: i32) -> (i32, i32, i32) {
    %c0_i32 = arith.constant 0 : i32
    %c0_i32_0 = arith.constant 0 : i32
    %c0_i32_1 = arith.constant 0 : i32
    return %arg0, %c0_i32, %c0_i32_0 : i32, i32, i32
  }
}

</mosaic_0001>

<llo_original>
// kernel: tpu_custom_call.1
$region0: #{tpu_custom_call.1}
  #allocation0 [shape = 'u32[]', space=smem, size = 0x4, offset = 0x4, fixed_abs, tag = 'smem constant byte address 0x4 - core index']
  #allocation1 [shape = 'u32[72,128]{1,0:T(1,128)}', space=vmem, size = 0x9000, scoped, tag = 'internal scratch']
  %s0 = inlined_call_operand.hbm [shape: f32[16,128], index: 0, kind: input, shape index: {}]
  %s1 = inlined_call_operand.hbm [shape: f32[16,128], index: 1, kind: input, shape index: {}]
  %s2 = inlined_call_operand.hbm [shape: f32[1,8,128], index: 2, kind: output, shape index: {0}]
  %s3 = inlined_call_operand.hbm [shape: f32[1,8,128], index: 3, kind: output, shape index: {1}]
  %4 = xla_tuple %s2, %s3
  %s5 = sld [smem:[#allocation0]]
  $region46: #{tpu_custom_call.1} parent=0
    _
  %s7 = ssub.s32 1, %s5
  %s8 = scalar_select 0, %s7, %s5
  $region1: #{tpu_custom_call.1} parent=0
    #allocation2 [shape = 'u8[8192]{0}', space=vmem, size = 0x2000, scoped, tag = 'input window, operand 0, single buffered']
    #allocation3 [shape = 's32[1]{0}', space=sflag, size = 0x4, scoped, tag = 'scoped memory for tpu_custom_call.1']
    #allocation4 [shape = 's32[1]{0}', space=sflag, size = 0x4, scoped, tag = 'scoped memory for tpu_custom_call.1']
    #allocation5 [shape = 'u8[8192]{0}', space=vmem, size = 0x2000, scoped, tag = 'input window, operand 1, single buffered']
    #allocation6 [shape = 's32[1]{0}', space=sflag, size = 0x4, scoped, tag = 'scoped memory for tpu_custom_call.1']
    #allocation7 [shape = 'u8[4096]{0}', space=vmem, size = 0x1000, scoped, tag = 'output window, operand 0, single buffered']
    #allocation8 [shape = 'u8[4096]{0}', space=vmem, size = 0x1000, scoped, tag = 'output window, operand 1, single buffered']
    #allocation9 [shape = 's32[1]{0}', space=sflag, size = 0x4, scoped, tag = 'scoped memory for tpu_custom_call.1']
    %9 = vsyncpa [#allocation3], 0
    %10 = vsyncpa [#allocation6], 0
    %11 = vsyncpa [#allocation4], 0
    %12 = vsyncpa [#allocation9], 0
    // Predicated region
    $region2: #{tpu_custom_call.1} parent=1 // pred_check
      _
    $region3: #{tpu_custom_call.1} parent=1 // pred_check_branch
      %14 = sbr.rel (0) target = $region5
    $region4: #{tpu_custom_call.1} parent=1 // pred_region
      %s15 = sadd.s32 0, 0
      %p16 = scmp.lt.s32.totalorder %s15, 0
      %s17 = scalar_select %p16, %s15, 0
      %s18 = smul.u32 2, %s17
      %20 = vsyncadd [#allocation3], 0
      %s21 = smul.addr %s18, 8
      %s22 = scalar_lea.hbm %s0, %s21
      %s23 = sshll.u32 %s22, 4
      %s24 = int_to_ptr.hbm [resolvable:$true] %s23
      %s25 = sshll.u32 [#allocation2], 4
      %s26 = int_to_ptr.vmem [resolvable:$true] %s25
      %31 = dma.hbm_to_vmem [thread:$0]  %s24, 256, %s26, [#allocation3], 128, 128, 8
    $region5: #{tpu_custom_call.1} parent=1 // pred_fallthru
      _
    // Predicated region
    $region6: #{tpu_custom_call.1} parent=1 // pred_check
      _
    $region7: #{tpu_custom_call.1} parent=1 // pred_check_branch
      %33 = sbr.rel (0) target = $region9
    $region8: #{tpu_custom_call.1} parent=1 // pred_region
      %s34 = sadd.s32 0, 0
      %p35 = scmp.lt.s32.totalorder %s34, 0
      %s36 = scalar_select %p35, %s34, 0
      %s37 = smul.u32 2, %s36
      %39 = vsyncadd [#allocation6], 0
      %s40 = smul.addr %s37, 8
      %s41 = scalar_lea.hbm %s1, %s40
      %s42 = sshll.u32 %s41, 4
      %s43 = int_to_ptr.hbm [resolvable:$true] %s42
      %s44 = sshll.u32 [#allocation5], 4
      %s45 = int_to_ptr.vmem [resolvable:$true] %s44
      %50 = dma.hbm_to_vmem [thread:$0]  %s43, 256, %s45, [#allocation6], 128, 128, 8
    $region9: #{tpu_custom_call.1} parent=1 // pred_fallthru
      _
    // Predicated region
    $region10: #{tpu_custom_call.1} parent=1 // pred_check
      _
    $region11: #{tpu_custom_call.1} parent=1 // pred_check_branch
      %52 = sbr.rel (0) target = $region13
    $region12: #{tpu_custom_call.1} parent=1 // pred_region
      %54 = dma.done [#allocation3], 256
    $region13: #{tpu_custom_call.1} parent=1 // pred_fallthru
      _
    // Predicated region
    $region14: #{tpu_custom_call.1} parent=1 // pred_check
      _
    $region15: #{tpu_custom_call.1} parent=1 // pred_check_branch
      %56 = sbr.rel (0) target = $region17
    $region16: #{tpu_custom_call.1} parent=1 // pred_region
      %58 = dma.done [#allocation6], 256
    $region17: #{tpu_custom_call.1} parent=1 // pred_fallthru
      _
    %s59 = sadd.s32 0, 0
    %p60 = scmp.lt.s32.totalorder %s59, 0
    %s61 = scalar_select %p60, %s59, 0
    %s62 = smul.u32 2, %s61
    %s63 = sadd.s32 0, 0
    %p64 = scmp.lt.s32.totalorder %s63, 0
    %s65 = scalar_select %p64, %s63, 0
    %s66 = smul.u32 2, %s65
    %p67 = scmp.eq.s32.totalorder 0, 0
    // Predicated region
    $region18: #{tpu_custom_call.1} parent=1 // pred_check
      %p68 = pneg %p67
    $region19: #{tpu_custom_call.1} parent=1 // pred_check_branch
      %70 = sbr.rel (%p68) target = $region21
    $region20: #{tpu_custom_call.1} parent=1 // pred_region
      %71 = vst [vmem:[#allocation7] sm:$0xff] 0.0
      %72 = vst [vmem:[#allocation8] sm:$0xff] 0.0
    $region21: #{tpu_custom_call.1} parent=1 // pred_fallthru
      _
    %s73 = sadd.s32 0, 0
    %s74 = smul.u32 %s73, 16
    %s75 = sadd.s32 %s74, 16
    %p76 = scmp.le.s32.totalorder %s75, 16
    // Predicated region
    $region22: #{tpu_custom_call.1} parent=1 // pred_check
      %p77 = pneg %p76
    $region23: #{tpu_custom_call.1} parent=1 // pred_check_branch
      %79 = sbr.rel (%p77) target = $region25
    $region24: #{tpu_custom_call.1} parent=1 // pred_region
      %v80 = vld [vmem:[#allocation2] sm:$0xff]
      %v81 = vld [vmem:[#allocation2 + $0x8] sm:$0xff]
      %v82 = vld [vmem:[#allocation5] sm:$0xff]
      %v83 = vld [vmem:[#allocation5 + $0x8] sm:$0xff]
      %v84 = vmul.f32 %v80, 0.5
      %v85 = vmul.f32 %v81, 0.5
      %v86 = vtanh.pop %v84
      %v87 = vtanh.pop %v85
      %v88 = vmul.f32 %v86, 0.5
      %v89 = vmul.f32 %v87, 0.5
      %v90 = vadd.f32 %v88, 0.5
      %v91 = vadd.f32 %v89, 0.5
      %v92 = vmul.f32 %v90, %v82
      %v93 = vmul.f32 %v91, %v83
      %v94 = vadd.f32 %v90, %v82
      %v95 = vadd.f32 %v91, %v83
      %v96 = vadd.f32 %v92, %v93
      %v97 = vadd.f32 %v96, 0.0
      %v98 = vadd.f32 %v94, %v95
      %v99 = vadd.f32 %v98, 0.0
      %v100 = vld [vmem:[#allocation7] sm:$0xff]
      %v101 = vadd.f32 %v100, %v97
      %102 = vst [vmem:[#allocation7] sm:$0xff] %v101
      %v103 = vld [vmem:[#allocation8] sm:$0xff]
      %v104 = vadd.f32 %v103, %v99
      %105 = vst [vmem:[#allocation8] sm:$0xff] %v104
    $region25: #{tpu_custom_call.1} parent=1 // pred_fallthru
      _
    %p106 = scmp.gt.s32.totalorder %s75, 16
    // Predicated region
    $region26: #{tpu_custom_call.1} parent=1 // pred_check
      %p107 = pneg %p106
    $region27: #{tpu_custom_call.1} parent=1 // pred_check_branch
      %109 = sbr.rel (%p107) target = $region29
    $region28: #{tpu_custom_call.1} parent=1 // pred_region
      %v110 = vld [vmem:[#allocation2] sm:$0xff]
      %v111 = vld [vmem:[#allocation2 + $0x8] sm:$0xff]
      %v112 = vld [vmem:[#allocation5] sm:$0xff]
      %v113 = vld [vmem:[#allocation5 + $0x8] sm:$0xff]
      %v114 = vmul.f32 %v110, 0.5
      %v115 = vmul.f32 %v111, 0.5
      %v116 = vtanh.pop %v114
      %v117 = vtanh.pop %v115
      %v118 = vmul.f32 %v116, 0.5
      %v119 = vmul.f32 %v117, 0.5
      %v120 = vadd.f32 %v118, 0.5
      %v121 = vadd.f32 %v119, 0.5
      %v122 = vlaneseq
      %v123 = vshrl.u32 %v122, 7
      %v124 = vadd.s32 %v123, 8
      %v125 = vstv %s74
      %v126 = vadd.s32 %v125, %v123
      %v127 = vadd.s32 %v125, %v124
      %vm128 = vcmp.lt.s32.totalorder %v126, 16
      %vm129 = vcmp.lt.s32.totalorder %v127, 16
      %v130 = vsel %vm128, %v120, 0.0
      %v131 = vsel %vm129, %v121, 0.0
      %v132 = vsel %vm128, %v112, 0.0
      %v133 = vsel %vm129, %v113, 0.0
      %v134 = vmul.f32 %v130, %v132
      %v135 = vmul.f32 %v131, %v133
      %v136 = vadd.f32 %v130, %v132
      %v137 = vadd.f32 %v131, %v133
      %v138 = vadd.f32 %v134, %v135
      %v139 = vadd.f32 %v138, 0.0
      %v140 = vadd.f32 %v136, %v137
      %v141 = vadd.f32 %v140, 0.0
      %v142 = vld [vmem:[#allocation7] sm:$0xff]
      %v143 = vadd.f32 %v142, %v139
      %144 = vst [vmem:[#allocation7] sm:$0xff] %v143
      %v145 = vld [vmem:[#allocation8] sm:$0xff]
      %v146 = vadd.f32 %v145, %v141
      %147 = vst [vmem:[#allocation8] sm:$0xff] %v146
    $region29: #{tpu_custom_call.1} parent=1 // pred_fallthru
      _
    // Predicated region
    $region30: #{tpu_custom_call.1} parent=1 // pred_check
      _
    $region31: #{tpu_custom_call.1} parent=1 // pred_check_branch
      %149 = sbr.rel (0) target = $region33
    $region32: #{tpu_custom_call.1} parent=1 // pred_region
      %151 = vsyncadd [#allocation4], 0
      %s153 = sshll.u32 [#allocation7], 4
      %s154 = int_to_ptr.vmem [resolvable:$true] %s153
      %s155 = sshll.u32 %s2, 4
      %s156 = int_to_ptr.hbm [resolvable:$true] %s155
      %158 = dma.vmem_to_hbm [thread:$0]  %s154, 128, %s156, [#allocation4]
    $region33: #{tpu_custom_call.1} parent=1 // pred_fallthru
      _
    // Predicated region
    $region34: #{tpu_custom_call.1} parent=1 // pred_check
      _
    $region35: #{tpu_custom_call.1} parent=1 // pred_check_branch
      %160 = sbr.rel (0) target = $region37
    $region36: #{tpu_custom_call.1} parent=1 // pred_region
      %162 = vsyncadd [#allocation9], 0
      %s164 = sshll.u32 [#allocation8], 4
      %s165 = int_to_ptr.vmem [resolvable:$true] %s164
      %s166 = sshll.u32 %s3, 4
      %s167 = int_to_ptr.hbm [resolvable:$true] %s166
      %169 = dma.vmem_to_hbm [thread:$0]  %s165, 128, %s167, [#allocation9]
    $region37: #{tpu_custom_call.1} parent=1 // pred_fallthru
      _
    // Predicated region
    $region38: #{tpu_custom_call.1} parent=1 // pred_check
      _
    $region39: #{tpu_custom_call.1} parent=1 // pred_check_branch
      %171 = sbr.rel (0) target = $region41
    $region40: #{tpu_custom_call.1} parent=1 // pred_region
      %173 = dma.done [#allocation4], 128
    $region41: #{tpu_custom_call.1} parent=1 // pred_fallthru
      _
    // Predicated region
    $region42: #{tpu_custom_call.1} parent=1 // pred_check
      _
    $region43: #{tpu_custom_call.1} parent=1 // pred_check_branch
      %175 = sbr.rel (0) target = $region45
    $region44: #{tpu_custom_call.1} parent=1 // pred_region
      %177 = dma.done [#allocation9], 128
    $region45: #{tpu_custom_call.1} parent=1 // pred_fallthru
      _
    %178 = vsyncpa [#allocation3], 1
    %179 = vsyncpa [#allocation6], 1
    %180 = vsyncpa [#allocation4], 1
    %181 = vsyncpa [#allocation9], 1

</llo_original>
